<compile_context>
chip_gen: v6e
topology: v6e:2x2x1
jax: 0.10.0
libtpu: 0.0.40
codegen_flags: <defaults>
</compile_context>

<pallas_src>
import jax
import jax.numpy as jnp
from jax.experimental import pallas as pl
from jax.experimental.pallas import tpu as pltpu

INPUT_FEATURES = 128
HIDDEN_FEATURES = 256
OUTPUT_FEATURES = 128
BATCH_SIZE = 32


def _ffn_kernel(x_ref, w1_ref, b1_ref, w2_ref, b2_ref, o_ref):
    # Cast to bf16 inside the kernel (no-op if operands are already bf16) so
    # the MXU runs its native bf16 path with f32 accumulation.
    x = x_ref[...].astype(jnp.bfloat16)
    w1 = w1_ref[...].astype(jnp.bfloat16)
    h = jnp.dot(x, w1, preferred_element_type=jnp.float32)
    h = jnp.maximum(h + b1_ref[...], 0.0)            # f32 epilogue (v5e-friendly)
    w2 = w2_ref[...].astype(jnp.bfloat16)
    o = jnp.dot(h.astype(jnp.bfloat16), w2, preferred_element_type=jnp.float32)
    o_ref[...] = (o + b2_ref[...]).astype(o_ref.dtype)


def _round_up(x, m):
    return ((x + m - 1) // m) * m


def triton_feedforward(x, w1, b1, w2, b2, *, tile_m=1024, out_dtype=jnp.float32):
    """x: [B, in], w1: [in, hid], b1: [hid], w2: [hid, out], b2: [out] -> [B, out]."""
    B, in_f = x.shape
    hid = w1.shape[1]
    out_f = w2.shape[1]

    # Biases kept f32 for the epilogue; reshape to [1, N] for lane-major broadcast.
    b1_2d = b1.reshape(1, hid).astype(jnp.float32)
    b2_2d = b2.reshape(1, out_f).astype(jnp.float32)

    def _nbytes(a):
        return a.size * a.dtype.itemsize

    cost = pl.CostEstimate(
        flops=2 * B * (in_f * hid + hid * out_f),
        transcendentals=0,
        bytes_accessed=(_nbytes(x) + _nbytes(w1) + _nbytes(w2)
                        + _nbytes(b1_2d) + _nbytes(b2_2d)
                        + B * out_f * jnp.dtype(out_dtype).itemsize),
    )

    if B <= tile_m:
        # Small/medium batch: single invocation, whole arrays resident in VMEM.
        # Bounded because B <= tile_m, so this never blows the scoped VMEM limit.
        vmem_spec = pl.BlockSpec(memory_space=pltpu.MemorySpace.VMEM)
        return pl.pallas_call(
            _ffn_kernel,
            out_shape=jax.ShapeDtypeStruct((B, out_f), out_dtype),
            in_specs=[vmem_spec] * 5,
            out_specs=vmem_spec,
            cost_estimate=cost,
        )(x, w1, b1_2d, w2, b2_2d)

    # Large batch: tile over M with cdiv (ragged last block handled by Pallas;
    # rows are independent so padded garbage rows never leak into real rows).
    # Keep >= 4 grid steps so v7x's two TensorCores each pipeline >= 2 tiles.
    steps = max(4, pl.cdiv(B, tile_m))
    tm = _round_up(pl.cdiv(B, steps), 8)       # sublane-aligned M tile
    grid = (pl.cdiv(B, tm),)

    return pl.pallas_call(
        _ffn_kernel,
        out_shape=jax.ShapeDtypeStruct((B, out_f), out_dtype),
        grid=grid,
        in_specs=[
            pl.BlockSpec((tm, in_f), lambda i: (i, 0)),
            # Weights/biases use a constant index_map, so they stay VMEM-resident
            # (no re-DMA) across grid steps.
            pl.BlockSpec((in_f, hid), lambda i: (0, 0)),
            pl.BlockSpec((1, hid), lambda i: (0, 0)),
            pl.BlockSpec((hid, out_f), lambda i: (0, 0)),
            pl.BlockSpec((1, out_f), lambda i: (0, 0)),
        ],
        out_specs=pl.BlockSpec((tm, out_f), lambda i: (i, 0)),
        compiler_params=pltpu.CompilerParams(
            dimension_semantics=("parallel",)),
        cost_estimate=cost,
    )(x, w1, b1_2d, w2, b2_2d)


if __name__ == "__main__":
    key = jax.random.PRNGKey(0)
    kx, k1, kb1, k2, kb2 = jax.random.split(key, 5)

    # Shapes from TritonFeedForward.__init__ / the driver script.
    x = jax.random.normal(kx, (BATCH_SIZE, INPUT_FEATURES), dtype=jnp.float32)
    w1 = jax.random.normal(k1, (INPUT_FEATURES, HIDDEN_FEATURES), dtype=jnp.float32)
    b1 = jax.random.normal(kb1, (HIDDEN_FEATURES,), dtype=jnp.float32)
    w2 = jax.random.normal(k2, (HIDDEN_FEATURES, OUTPUT_FEATURES), dtype=jnp.float32)
    b2 = jax.random.normal(kb2, (OUTPUT_FEATURES,), dtype=jnp.float32)

    # "Parameter-init time" cast: weights stored once as bf16 (no per-call cast).
    w1_p = w1.astype(jnp.bfloat16)
    w2_p = w2.astype(jnp.bfloat16)

    # Path 1: small-batch whole-array path (the B=32 case from the module).
    out = triton_feedforward(x, w1_p, b1, w2_p, b2)
    jax.block_until_ready(out)

    # Path 2: batch-tiled pipelined path, exercised at small shapes by forcing
    # a tiny tile (grid = cdiv(32, 8) = 4 steps).
    out_tiled = triton_feedforward(x, w1_p, b1, w2_p, b2, tile_m=8)
    jax.block_until_ready(out_tiled)

    # Pure-JAX reference with identical bf16 quantization of x / W / hidden,
    # f32 accumulation — isolates kernel bugs from the precision choice.
    xq = x.astype(jnp.bfloat16).astype(jnp.float32)
    w1q = w1_p.astype(jnp.float32)
    w2q = w2_p.astype(jnp.float32)
    h_ref = jnp.maximum(xq @ w1q + b1, 0.0)
    h_ref = h_ref.astype(jnp.bfloat16).astype(jnp.float32)
    ref = h_ref @ w2q + b2

    assert out.shape == (BATCH_SIZE, OUTPUT_FEATURES)
    assert out.dtype == jnp.float32
    assert jnp.allclose(out, ref, atol=1e-1, rtol=1e-2)
    assert jnp.allclose(out_tiled, ref, atol=1e-1, rtol=1e-2)

    print("KERNEL_OK")
</pallas_src>

<mosaic_0001>
module attributes {stable_mosaic.version = 11 : i64} {
  func.func @_ffn_kernel(%arg0: memref<32x128xf32, #tpu.memory_space<vmem>>, %arg1: memref<128x256xbf16, #tpu.memory_space<vmem>>, %arg2: memref<1x256xf32, #tpu.memory_space<vmem>>, %arg3: memref<256x128xbf16, #tpu.memory_space<vmem>>, %arg4: memref<1x128xf32, #tpu.memory_space<vmem>>, %arg5: memref<32x128xf32, #tpu.memory_space<vmem>>) attributes {dimension_semantics = [], scalar_prefetch = 0 : i64, scratch_operands = 0 : i64, tpu.core_type = #tpu.core_type<tc>} {
    %c0 = arith.constant 0 : index
    %c0_0 = arith.constant 0 : index
    %0 = vector.load %arg0[%c0, %c0_0] : memref<32x128xf32, #tpu.memory_space<vmem>>, vector<32x128xf32>
    %1 = arith.truncf %0 : vector<32x128xf32> to vector<32x128xbf16>
    %c0_1 = arith.constant 0 : index
    %c0_2 = arith.constant 0 : index
    %2 = vector.load %arg1[%c0_1, %c0_2] : memref<128x256xbf16, #tpu.memory_space<vmem>>, vector<128x256xbf16>
    %cst = arith.constant dense<0.000000e+00> : vector<32x256xf32>
    %3 = tpu.matmul %1, %2, %cst {dimension_numbers = #tpu.dot_dimension_numbers<[1], [0], [0], [1], [0, 0, 1, 1], [], []>} : vector<32x128xbf16>, vector<128x256xbf16>, vector<32x256xf32> -> vector<32x256xf32>
    %c0_3 = arith.constant 0 : index
    %c0_4 = arith.constant 0 : index
    %4 = vector.load %arg2[%c0_3, %c0_4] : memref<1x256xf32, #tpu.memory_space<vmem>>, vector<1x256xf32>
    %5 = vector.broadcast %4 : vector<1x256xf32> to vector<32x256xf32>
    %6 = arith.addf %3, %5 : vector<32x256xf32>
    %cst_5 = arith.constant 0.000000e+00 : f32
    %7 = vector.broadcast %cst_5 : f32 to vector<32x256xf32>
    %8 = arith.maximumf %6, %7 : vector<32x256xf32>
    %c0_6 = arith.constant 0 : index
    %c0_7 = arith.constant 0 : index
    %9 = vector.load %arg3[%c0_6, %c0_7] : memref<256x128xbf16, #tpu.memory_space<vmem>>, vector<256x128xbf16>
    %10 = arith.truncf %8 : vector<32x256xf32> to vector<32x256xbf16>
    %cst_8 = arith.constant dense<0.000000e+00> : vector<32x128xf32>
    %11 = tpu.matmul %10, %9, %cst_8 {dimension_numbers = #tpu.dot_dimension_numbers<[1], [0], [0], [1], [0, 0, 1, 1], [], []>} : vector<32x256xbf16>, vector<256x128xbf16>, vector<32x128xf32> -> vector<32x128xf32>
    %c0_9 = arith.constant 0 : index
    %c0_10 = arith.constant 0 : index
    %12 = vector.load %arg4[%c0_9, %c0_10] : memref<1x128xf32, #tpu.memory_space<vmem>>, vector<1x128xf32>
    %13 = vector.broadcast %12 : vector<1x128xf32> to vector<32x128xf32>
    %14 = arith.addf %11, %13 : vector<32x128xf32>
    %c0_11 = arith.constant 0 : index
    %c0_12 = arith.constant 0 : index
    %15 = vector.load %arg5[%c0_11, %c0_12] : memref<32x128xf32, #tpu.memory_space<vmem>>, vector<32x128xf32>
    tpu.vector_store %arg5[%c0_11, %c0_12], %14 {strides = array<i32>} : memref<32x128xf32, #tpu.memory_space<vmem>>, vector<32x128xf32>,
    return
  }
}

</mosaic_0001>

<llo_original>
// kernel: tpu_custom_call.1
$region0: #{tpu_custom_call.1}
  #allocation0 [shape = 'u32[]', space=smem, size = 0x4, offset = 0x4, fixed_abs, tag = 'smem constant byte address 0x4 - core index']
  #allocation1 [shape = 'u32[144,128]{1,0:T(1,128)}', space=vmem, size = 0x12000, scoped, tag = 'internal scratch']
  %s0 = inlined_call_operand.hbm [shape: f32[32,128], index: 0, kind: input, shape index: {}]
  %s1 = inlined_call_operand.hbm [shape: bf16[128,256], index: 1, kind: input, shape index: {}]
  %s2 = inlined_call_operand.vmem [shape: f32[1,256], index: 2, kind: input, shape index: {}]
  %s3 = inlined_call_operand.hbm [shape: bf16[256,128], index: 3, kind: input, shape index: {}]
  %s4 = inlined_call_operand.vmem [shape: f32[1,128], index: 4, kind: input, shape index: {}]
  %s5 = inlined_call_operand.hbm [shape: f32[32,128], index: 5, kind: output, shape index: {}]
  %s6 = sld [smem:[#allocation0]]
  $region42: #{tpu_custom_call.1} parent=0
    _
  %s8 = ssub.s32 1, %s6
  %s9 = scalar_select 0, %s8, %s6
  $region1: #{tpu_custom_call.1} parent=0
    #allocation2 [shape = 'u8[16384]{0}', space=vmem, size = 0x4000, scoped, tag = 'input window, operand 0, single buffered']
    #allocation3 [shape = 's32[1]{0}', space=sflag, size = 0x4, scoped, tag = 'scoped memory for tpu_custom_call.1']
    #allocation4 [shape = 's32[1]{0}', space=sflag, size = 0x4, scoped, tag = 'scoped memory for tpu_custom_call.1']
    #allocation5 [shape = 'u8[65536]{0}', space=vmem, size = 0x10000, scoped, tag = 'input window, operand 1, single buffered']
    #allocation6 [shape = 's32[1]{0}', space=sflag, size = 0x4, scoped, tag = 'scoped memory for tpu_custom_call.1']
    #allocation7 [shape = 'u8[65536]{0}', space=vmem, size = 0x10000, scoped, tag = 'input window, operand 3, single buffered']
    #allocation8 [shape = 'u8[16384]{0}', space=vmem, size = 0x4000, scoped, tag = 'output window, operand 0, single buffered']
    %10 = vsyncpa [#allocation3], 0
    %11 = vsyncpa [#allocation6], 0
    %12 = vsyncpa [#allocation4], 0
    // Predicated region
    $region2: #{tpu_custom_call.1} parent=1 // pred_check
      _
    $region3: #{tpu_custom_call.1} parent=1 // pred_check_branch
      %14 = sbr.rel (0) target = $region5
    $region4: #{tpu_custom_call.1} parent=1 // pred_region
      %s16 = ssub.s32 512, 512
      %17 = vsyncadd [#allocation3], %s16
      %s18 = sshll.u32 [#allocation2], 4
      %s19 = int_to_ptr.vmem [resolvable:$true] %s18
      %24 = dma.hbm_to_vmem [thread:$0]  %s0, 512, %s19, [#allocation3], 128, 128, 8
    $region5: #{tpu_custom_call.1} parent=1 // pred_fallthru
      _
    // Predicated region
    $region6: #{tpu_custom_call.1} parent=1 // pred_check
      _
    $region7: #{tpu_custom_call.1} parent=1 // pred_check_branch
      %26 = sbr.rel (0) target = $region9
    $region8: #{tpu_custom_call.1} parent=1 // pred_region
      %s28 = ssub.s32 2048, 2048
      %29 = vsyncadd [#allocation6], %s28
      %s30 = sshll.u32 [#allocation5], 4
      %s31 = int_to_ptr.vmem [resolvable:$true] %s30
      %36 = dma.hbm_to_vmem [thread:$0]  %s1, 2048, %s31, [#allocation6], 128, 128, 8
    $region9: #{tpu_custom_call.1} parent=1 // pred_fallthru
      _
    // Predicated region
    $region10: #{tpu_custom_call.1} parent=1 // pred_check
      _
    $region11: #{tpu_custom_call.1} parent=1 // pred_check_branch
      %38 = sbr.rel (0) target = $region13
    $region12: #{tpu_custom_call.1} parent=1 // pred_region
      _
    $region13: #{tpu_custom_call.1} parent=1 // pred_fallthru
      _
    // Predicated region
    $region14: #{tpu_custom_call.1} parent=1 // pred_check
      _
    $region15: #{tpu_custom_call.1} parent=1 // pred_check_branch
      %40 = sbr.rel (0) target = $region17
    $region16: #{tpu_custom_call.1} parent=1 // pred_region
      %s42 = ssub.s32 2048, 2048
      %43 = vsyncadd [#allocation6], %s42
      %s44 = sshll.u32 [#allocation7], 4
      %s45 = int_to_ptr.vmem [resolvable:$true] %s44
      %50 = dma.hbm_to_vmem [thread:$0]  %s3, 2048, %s45, [#allocation6], 64, 64, 4
    $region17: #{tpu_custom_call.1} parent=1 // pred_fallthru
      _
    // Predicated region
    $region18: #{tpu_custom_call.1} parent=1 // pred_check
      _
    $region19: #{tpu_custom_call.1} parent=1 // pred_check_branch
      %52 = sbr.rel (0) target = $region21
    $region20: #{tpu_custom_call.1} parent=1 // pred_region
      _
    $region21: #{tpu_custom_call.1} parent=1 // pred_fallthru
      _
    // Predicated region
    $region22: #{tpu_custom_call.1} parent=1 // pred_check
      _
    $region23: #{tpu_custom_call.1} parent=1 // pred_check_branch
      %54 = sbr.rel (0) target = $region25
    $region24: #{tpu_custom_call.1} parent=1 // pred_region
      %55 = dma.done [#allocation3], 512
    $region25: #{tpu_custom_call.1} parent=1 // pred_fallthru
      _
    // Predicated region
    $region26: #{tpu_custom_call.1} parent=1 // pred_check
      _
    $region27: #{tpu_custom_call.1} parent=1 // pred_check_branch
      %57 = sbr.rel (0) target = $region29
    $region28: #{tpu_custom_call.1} parent=1 // pred_region
      %58 = dma.done [#allocation6], 2048
    $region29: #{tpu_custom_call.1} parent=1 // pred_fallthru
      _
    // Predicated region
    $region30: #{tpu_custom_call.1} parent=1 // pred_check
      _
    $region31: #{tpu_custom_call.1} parent=1 // pred_check_branch
      %60 = sbr.rel (0) target = $region33
    $region32: #{tpu_custom_call.1} parent=1 // pred_region
      %61 = dma.done [#allocation6], 2048
    $region33: #{tpu_custom_call.1} parent=1 // pred_fallthru
      _
    %v63 = vld [vmem:[#allocation2] sm:$0xff]
    %v64 = vld [vmem:[#allocation2 + $0x8] sm:$0xff]
    %v65 = vld [vmem:[#allocation2 + $0x10] sm:$0xff]
    %v66 = vld [vmem:[#allocation2 + $0x18] sm:$0xff]
    %v67 = vpack.c.bf16 %v64, %v63
    %v68 = vpack.c.bf16 %v66, %v65
    %v69 = vld [vmem:[#allocation5] sm:$0xff]
    %v70 = vld [vmem:[#allocation5 + $0x8] sm:$0xff]
    %v71 = vld [vmem:[#allocation5 + $0x10] sm:$0xff]
    %v72 = vld [vmem:[#allocation5 + $0x18] sm:$0xff]
    %v73 = vld [vmem:[#allocation5 + $0x20] sm:$0xff]
    %v74 = vld [vmem:[#allocation5 + $0x28] sm:$0xff]
    %v75 = vld [vmem:[#allocation5 + $0x30] sm:$0xff]
    %v76 = vld [vmem:[#allocation5 + $0x38] sm:$0xff]
    %v77 = vld [vmem:[#allocation5 + $0x40] sm:$0xff]
    %v78 = vld [vmem:[#allocation5 + $0x48] sm:$0xff]
    %v79 = vld [vmem:[#allocation5 + $0x50] sm:$0xff]
    %v80 = vld [vmem:[#allocation5 + $0x58] sm:$0xff]
    %v81 = vld [vmem:[#allocation5 + $0x60] sm:$0xff]
    %v82 = vld [vmem:[#allocation5 + $0x68] sm:$0xff]
    %v83 = vld [vmem:[#allocation5 + $0x70] sm:$0xff]
    %v84 = vld [vmem:[#allocation5 + $0x78] sm:$0xff]
    %v85 = vld [vmem:[%s2] sm:$0x3]
    %v87 = vlaneseq
    %v88 = vshrl.u32 %v87, 7
    %v89 = vsub.s32 0, %v88
    %v90 = vrot.slane %v85, %v89
    %v91 = vlaneseq
    %v92 = vshrl.u32 %v91, 7
    %v93 = vsub.s32 1, %v92
    %v94 = vrot.slane %v85, %v93
    %v113 = vunpack.c.l.b16 %v69
    %v114 = vunpack.c.h.b16 %v69
    %v115 = vunpack.c.l.b16 %v70
    %v116 = vunpack.c.h.b16 %v70
    %v117 = vunpack.c.l.b16 %v71
    %v118 = vunpack.c.h.b16 %v71
    %v119 = vunpack.c.l.b16 %v72
    %v120 = vunpack.c.h.b16 %v72
    %v121 = vunpack.c.l.b16 %v73
    %v122 = vunpack.c.h.b16 %v73
    %v123 = vunpack.c.l.b16 %v74
    %v124 = vunpack.c.h.b16 %v74
    %v125 = vunpack.c.l.b16 %v75
    %v126 = vunpack.c.h.b16 %v75
    %v127 = vunpack.c.l.b16 %v76
    %v128 = vunpack.c.h.b16 %v76
    %v129 = vunpack.c.l.b16 %v77
    %v130 = vunpack.c.h.b16 %v77
    %v131 = vunpack.c.l.b16 %v78
    %v132 = vunpack.c.h.b16 %v78
    %v133 = vunpack.c.l.b16 %v79
    %v134 = vunpack.c.h.b16 %v79
    %v135 = vunpack.c.l.b16 %v80
    %v136 = vunpack.c.h.b16 %v80
    %v137 = vunpack.c.l.b16 %v81
    %v138 = vunpack.c.h.b16 %v81
    %v139 = vunpack.c.l.b16 %v82
    %v140 = vunpack.c.h.b16 %v82
    %v141 = vunpack.c.l.b16 %v83
    %v142 = vunpack.c.h.b16 %v83
    %v143 = vunpack.c.l.b16 %v84
    %v144 = vunpack.c.h.b16 %v84
    %v145 = vpack.c.b16 %v115, %v113
    %v146 = vpack.c.b16 %v116, %v114
    %v147 = vpack.c.b16 %v119, %v117
    %v148 = vpack.c.b16 %v120, %v118
    %v149 = vpack.c.b16 %v123, %v121
    %v150 = vpack.c.b16 %v124, %v122
    %v151 = vpack.c.b16 %v127, %v125
    %v152 = vpack.c.b16 %v128, %v126
    %v153 = vpack.c.b16 %v131, %v129
    %v154 = vpack.c.b16 %v132, %v130
    %v155 = vpack.c.b16 %v135, %v133
    %v156 = vpack.c.b16 %v136, %v134
    %v157 = vpack.c.b16 %v139, %v137
    %v158 = vpack.c.b16 %v140, %v138
    %v159 = vpack.c.b16 %v143, %v141
    %v160 = vpack.c.b16 %v144, %v142
    %177 = vmatprep.subr.bf16.mxu0 %v160
    %178 = vmatpush1.bf16.msra.mxu0 %v159
    %179 = vmatprep.subr.bf16.mxu0 %v158
    %180 = vmatpush1.bf16.msra.mxu0 %v157
    %181 = vmatprep.subr.bf16.mxu0 %v156
    %182 = vmatpush1.bf16.msra.mxu0 %v155
    %183 = vmatprep.subr.bf16.mxu0 %v154
    %184 = vmatpush1.bf16.msra.mxu0 %v153
    %185 = vmatprep.subr.bf16.mxu0 %v152
    %186 = vmatpush1.bf16.msra.mxu0 %v151
    %187 = vmatprep.subr.bf16.mxu0 %v150
    %188 = vmatpush1.bf16.msra.mxu0 %v149
    %189 = vmatprep.subr.bf16.mxu0 %v148
    %190 = vmatpush1.bf16.msra.mxu0 %v147
    %191 = vmatprep.subr.bf16.mxu0 %v146
    %192 = vmatpush1.bf16.msra.mxu0 %v145
    %193 = vmatprep.subr.bf16.mxu0 0
    %194 = vmatpush2.bf16.msra.mxu0 0
    %195 = vmatprep.subr.bf16.mxu0 0
    %196 = vmatpush2.bf16.msra.mxu0 0
    %197 = vmatprep.subr.bf16.mxu0 0
    %198 = vmatpush2.bf16.msra.mxu0 0
    %199 = vmatprep.subr.bf16.mxu0 0
    %200 = vmatpush2.bf16.msra.mxu0 0
    %201 = vmatprep.subr.bf16.mxu0 0
    %202 = vmatpush2.bf16.msra.mxu0 0
    %203 = vmatprep.subr.bf16.mxu0 0
    %204 = vmatpush2.bf16.msra.mxu0 0
    %205 = vmatprep.subr.bf16.mxu0 0
    %206 = vmatpush2.bf16.msra.mxu0 0
    %207 = vmatprep.subr.bf16.mxu0 0
    %208 = vmatpush2.bf16.msra.mxu0 0
    %209 = vmatprep.mubr.bf16.mxu0 0
    %210 = vmatmul.mubr.bf16.gmra.mxu0 %v67
    %v211 = vpop.f32.mrf.mxu0
    %v212 = vadd.f32 %v90, %v211
    %v213 = vpop.f32.mrf.mxu0
    %v214 = vadd.f32 %v94, %v213
    %v215 = vpop.f32.mrf.mxu0
    %v216 = vadd.f32 %v90, %v215
    %v217 = vpop.f32.mrf.mxu0
    %v218 = vadd.f32 %v94, %v217
    %219 = vmatprep.mubr.bf16.mxu0 0
    %220 = vmatmul.mubr.bf16.gmra.mxu0 %v68
    %v221 = vpop.f32.mrf.mxu0
    %v222 = vadd.f32 %v90, %v221
    %v223 = vpop.f32.mrf.mxu0
    %v224 = vadd.f32 %v94, %v223
    %v225 = vpop.f32.mrf.mxu0
    %v226 = vadd.f32 %v90, %v225
    %v227 = vpop.f32.mrf.mxu0
    %v228 = vadd.f32 %v94, %v227
    %229 = vdwg.mxu0
    %v230 = vmax.f32 %v212, 0.0
    %v231 = vmax.f32 %v214, 0.0
    %v232 = vmax.f32 %v216, 0.0
    %v233 = vmax.f32 %v218, 0.0
    %v234 = vmax.f32 %v222, 0.0
    %v235 = vmax.f32 %v224, 0.0
    %v236 = vmax.f32 %v226, 0.0
    %v237 = vmax.f32 %v228, 0.0
    %v238 = vld [vmem:[#allocation7] sm:$0xf]
    %v239 = vld [vmem:[#allocation7 + $0x4] sm:$0xf]
    %v240 = vld [vmem:[#allocation7 + $0x8] sm:$0xf]
    %v241 = vld [vmem:[#allocation7 + $0xc] sm:$0xf]
    %v242 = vld [vmem:[#allocation7 + $0x10] sm:$0xf]
    %v243 = vld [vmem:[#allocation7 + $0x14] sm:$0xf]
    %v244 = vld [vmem:[#allocation7 + $0x18] sm:$0xf]
    %v245 = vld [vmem:[#allocation7 + $0x1c] sm:$0xf]
    %v246 = vld [vmem:[#allocation7 + $0x20] sm:$0xf]
    %v247 = vld [vmem:[#allocation7 + $0x24] sm:$0xf]
    %v248 = vld [vmem:[#allocation7 + $0x28] sm:$0xf]
    %v249 = vld [vmem:[#allocation7 + $0x2c] sm:$0xf]
    %v250 = vld [vmem:[#allocation7 + $0x30] sm:$0xf]
    %v251 = vld [vmem:[#allocation7 + $0x34] sm:$0xf]
    %v252 = vld [vmem:[#allocation7 + $0x38] sm:$0xf]
    %v253 = vld [vmem:[#allocation7 + $0x3c] sm:$0xf]
    %v254 = vld [vmem:[#allocation7 + $0x40] sm:$0xf]
    %v255 = vld [vmem:[#allocation7 + $0x44] sm:$0xf]
    %v256 = vld [vmem:[#allocation7 + $0x48] sm:$0xf]
    %v257 = vld [vmem:[#allocation7 + $0x4c] sm:$0xf]
    %v258 = vld [vmem:[#allocation7 + $0x50] sm:$0xf]
    %v259 = vld [vmem:[#allocation7 + $0x54] sm:$0xf]
    %v260 = vld [vmem:[#allocation7 + $0x58] sm:$0xf]
    %v261 = vld [vmem:[#allocation7 + $0x5c] sm:$0xf]
    %v262 = vld [vmem:[#allocation7 + $0x60] sm:$0xf]
    %v263 = vld [vmem:[#allocation7 + $0x64] sm:$0xf]
    %v264 = vld [vmem:[#allocation7 + $0x68] sm:$0xf]
    %v265 = vld [vmem:[#allocation7 + $0x6c] sm:$0xf]
    %v266 = vld [vmem:[#allocation7 + $0x70] sm:$0xf]
    %v267 = vld [vmem:[#allocation7 + $0x74] sm:$0xf]
    %v268 = vld [vmem:[#allocation7 + $0x78] sm:$0xf]
    %v269 = vld [vmem:[#allocation7 + $0x7c] sm:$0xf]
    %v270 = vpack.c.bf16 %v232, %v230
    %v271 = vpack.c.bf16 %v233, %v231
    %v272 = vpack.c.bf16 %v236, %v234
    %v273 = vpack.c.bf16 %v237, %v235
    %v274 = vld [vmem:[%s4] sm:$0x1]
    %v276 = vlaneseq
    %v277 = vshrl.u32 %v276, 7
    %v278 = vsub.s32 0, %v277
    %v279 = vrot.slane %v274, %v278
    %v313 = vunpack.c.l.b16 %v238
    %v314 = vunpack.c.l.b16 %v239
    %v315 = vunpack.c.l.b16 %v240
    %v316 = vunpack.c.l.b16 %v241
    %v317 = vunpack.c.l.b16 %v242
    %v318 = vunpack.c.l.b16 %v243
    %v319 = vunpack.c.l.b16 %v244
    %v320 = vunpack.c.l.b16 %v245
    %v321 = vunpack.c.l.b16 %v246
    %v322 = vunpack.c.l.b16 %v247
    %v323 = vunpack.c.l.b16 %v248
    %v324 = vunpack.c.l.b16 %v249
    %v325 = vunpack.c.l.b16 %v250
    %v326 = vunpack.c.l.b16 %v251
    %v327 = vunpack.c.l.b16 %v252
    %v328 = vunpack.c.l.b16 %v253
    %v329 = vunpack.c.l.b16 %v254
    %v330 = vunpack.c.l.b16 %v255
    %v331 = vunpack.c.l.b16 %v256
    %v332 = vunpack.c.l.b16 %v257
    %v333 = vunpack.c.l.b16 %v258
    %v334 = vunpack.c.l.b16 %v259
    %v335 = vunpack.c.l.b16 %v260
    %v336 = vunpack.c.l.b16 %v261
    %v337 = vunpack.c.l.b16 %v262
    %v338 = vunpack.c.l.b16 %v263
    %v339 = vunpack.c.l.b16 %v264
    %v340 = vunpack.c.l.b16 %v265
    %v341 = vunpack.c.l.b16 %v266
    %v342 = vunpack.c.l.b16 %v267
    %v343 = vunpack.c.l.b16 %v268
    %v344 = vunpack.c.l.b16 %v269
    %v345 = vpack.c.b16 %v314, %v313
    %v346 = vpack.c.b16 %v316, %v315
    %v347 = vpack.c.b16 %v318, %v317
    %v348 = vpack.c.b16 %v320, %v319
    %v349 = vpack.c.b16 %v322, %v321
    %v350 = vpack.c.b16 %v324, %v323
    %v351 = vpack.c.b16 %v326, %v325
    %v352 = vpack.c.b16 %v328, %v327
    %v353 = vpack.c.b16 %v330, %v329
    %v354 = vpack.c.b16 %v332, %v331
    %v355 = vpack.c.b16 %v334, %v333
    %v356 = vpack.c.b16 %v336, %v335
    %v357 = vpack.c.b16 %v338, %v337
    %v358 = vpack.c.b16 %v340, %v339
    %v359 = vpack.c.b16 %v342, %v341
    %v360 = vpack.c.b16 %v344, %v343
    %377 = vmatprep.subr.bf16.mxu0 0
    %378 = vmatpush1.bf16.msra.mxu0 %v352
    %379 = vmatprep.subr.bf16.mxu0 0
    %380 = vmatpush1.bf16.msra.mxu0 %v351
    %381 = vmatprep.subr.bf16.mxu0 0
    %382 = vmatpush1.bf16.msra.mxu0 %v350
    %383 = vmatprep.subr.bf16.mxu0 0
    %384 = vmatpush1.bf16.msra.mxu0 %v349
    %385 = vmatprep.subr.bf16.mxu0 0
    %386 = vmatpush1.bf16.msra.mxu0 %v348
    %387 = vmatprep.subr.bf16.mxu0 0
    %388 = vmatpush1.bf16.msra.mxu0 %v347
    %389 = vmatprep.subr.bf16.mxu0 0
    %390 = vmatpush1.bf16.msra.mxu0 %v346
    %391 = vmatprep.subr.bf16.mxu0 0
    %392 = vmatpush1.bf16.msra.mxu0 %v345
    %393 = vmatprep.subr.bf16.mxu0 0
    %394 = vmatpush2.bf16.msra.mxu0 %v360
    %395 = vmatprep.subr.bf16.mxu0 0
    %396 = vmatpush2.bf16.msra.mxu0 %v359
    %397 = vmatprep.subr.bf16.mxu0 0
    %398 = vmatpush2.bf16.msra.mxu0 %v358
    %399 = vmatprep.subr.bf16.mxu0 0
    %400 = vmatpush2.bf16.msra.mxu0 %v357
    %401 = vmatprep.subr.bf16.mxu0 0
    %402 = vmatpush2.bf16.msra.mxu0 %v356
    %403 = vmatprep.subr.bf16.mxu0 0
    %404 = vmatpush2.bf16.msra.mxu0 %v355
    %405 = vmatprep.subr.bf16.mxu0 0
    %406 = vmatpush2.bf16.msra.mxu0 %v354
    %407 = vmatprep.subr.bf16.mxu0 0
    %408 = vmatpush2.bf16.msra.mxu0 %v353
    %409 = vmatprep.mubr.bf16.mxu0 %v271
    %410 = vmatmul.mubr.bf16.gmra.mxu0 %v270
    %v411 = vpop.f32.mrf.mxu0
    %v412 = vadd.f32 %v279, %v411
    %v413 = vpop.f32.mrf.mxu0
    %v414 = vpop.f32.mrf.mxu0
    %v415 = vadd.f32 %v279, %v414
    %v416 = vpop.f32.mrf.mxu0
    %417 = vmatprep.mubr.bf16.mxu0 %v273
    %418 = vmatmul.mubr.bf16.gmra.mxu0 %v272
    %v419 = vpop.f32.mrf.mxu0
    %v420 = vadd.f32 %v279, %v419
    %v421 = vpop.f32.mrf.mxu0
    %v422 = vpop.f32.mrf.mxu0
    %v423 = vadd.f32 %v279, %v422
    %v424 = vpop.f32.mrf.mxu0
    %425 = vdwg.mxu0
    %426 = vst [vmem:[#allocation8] sm:$0xff] %v412
    %427 = vst [vmem:[#allocation8 + $0x8] sm:$0xff] %v415
    %428 = vst [vmem:[#allocation8 + $0x10] sm:$0xff] %v420
    %429 = vst [vmem:[#allocation8 + $0x18] sm:$0xff] %v423
    // Predicated region
    $region34: #{tpu_custom_call.1} parent=1 // pred_check
      _
    $region35: #{tpu_custom_call.1} parent=1 // pred_check_branch
      %431 = sbr.rel (0) target = $region37
    $region36: #{tpu_custom_call.1} parent=1 // pred_region
      %s433 = ssub.s32 512, 512
      %434 = vsyncadd [#allocation4], %s433
      %s435 = sshll.u32 [#allocation8], 4
      %s436 = int_to_ptr.vmem [resolvable:$true] %s435
      %441 = dma.vmem_to_hbm [thread:$0]  %s436, 512, %s5, [#allocation4], 128, 128, 8
    $region37: #{tpu_custom_call.1} parent=1 // pred_fallthru
      _
    // Predicated region
    $region38: #{tpu_custom_call.1} parent=1 // pred_check
      _
    $region39: #{tpu_custom_call.1} parent=1 // pred_check_branch
      %443 = sbr.rel (0) target = $region41
    $region40: #{tpu_custom_call.1} parent=1 // pred_region
      %444 = dma.done [#allocation4], 512
    $region41: #{tpu_custom_call.1} parent=1 // pred_fallthru
      _
    %445 = vsyncpa [#allocation3], 1
    %446 = vsyncpa [#allocation6], 1
    %447 = vsyncpa [#allocation4], 1

</llo_original>
